<compile_context>
chip_gen: v6e
topology: v6e:2x2x1
jax: 0.10.0
libtpu: 0.0.40
codegen_flags: <defaults>
</compile_context>

<pallas_src>
import math
from functools import partial

import jax
import jax.numpy as jnp
from jax.experimental import pallas as pl
from jax.experimental.pallas import tpu as pltpu


def rgan_kernel(z_ref, state_ref, w_lstm_ref, w_out_ref, y_ref, *,
                B, T, Nz, H, O, apply_sigmoid):
    """Whole forward pass in one kernel invocation (recurrence unrolled).

    z_ref:      (T*B, Nz)            time-major flattened noise
    state_ref:  (2B, H)              rows [0:B]=h0, [B:2B]=c0
    w_lstm_ref: (Nz_pad+H+1, 4H)     rows [0:Nz]=W_ih, [Nz_pad:Nz_pad+H]=W_hh,
                                     [Nz_pad+H]=b (=b_ih+b_hh); gate order i,f,g,o
    w_out_ref:  (H+1, O)             rows [0:H]=W_lin, [H]=b_lin
    y_ref:      (T*B, O)             time-major flattened output
    """
    nz_pad = ((Nz + 7) // 8) * 8  # padded W_ih rows (sublane-aligned packing)

    # ---- Unpack packed params with static slices (loop-invariant) ----------
    w_ih = w_lstm_ref[0:Nz, :]                                  # (Nz, 4H)
    w_hh = w_lstm_ref[nz_pad:nz_pad + H, :]                     # (H, 4H)
    b = w_lstm_ref[nz_pad + H:nz_pad + H + 1, :]                # (1, 4H)

    w_lin = w_out_ref[0:H, :]                                   # (H, O)
    b_lin = w_out_ref[H:H + 1, :]                               # (1, O)

    h = state_ref[0:B, :]                                       # (B, H)
    c = state_ref[B:2 * B, :]                                   # (B, H)

    # ---- All T input projections + gate bias in ONE MXU call ---------------
    x_proj = jnp.dot(z_ref[...], w_ih,
                     preferred_element_type=jnp.float32) + b    # (T*B, 4H)

    # ---- Fully unrolled LSTM recurrence (T small & static) -----------------
    hs = []
    for t in range(T):
        gates = jnp.dot(h, w_hh, preferred_element_type=jnp.float32) \
            + x_proj[t * B:(t + 1) * B, :]                      # (B, 4H)

        # One wide sigmoid + one wide tanh over the full 4H-lane vreg, then
        # static lane slices.  PyTorch gate order: i, f, g, o.
        g_sig = jax.nn.sigmoid(gates)
        g_tanh = jnp.tanh(gates)
        i_g = g_sig[:, 0 * H:1 * H]
        f_g = g_sig[:, 1 * H:2 * H]
        g_g = g_tanh[:, 2 * H:3 * H]
        o_g = g_sig[:, 3 * H:4 * H]

        c = f_g * c + i_g * g_g
        h = o_g * jnp.tanh(c)
        hs.append(h)                                            # stays in vregs

    # ---- Time-shared Linear (+ optional sigmoid), single dense writeback ---
    hs_all = jnp.concatenate(hs, axis=0)                        # (T*B, H) time-major
    y = jnp.dot(hs_all, w_lin, preferred_element_type=jnp.float32) + b_lin
    if apply_sigmoid:
        y = jax.nn.sigmoid(y)
    y_ref[...] = y.astype(y_ref.dtype)


def rgan_generator_forward(z, h0, c0, params, apply_sigmoid=True):
    """z: (B, T, noise), h0/c0: (B, H)  ->  (B, T, output)."""
    B, T, Nz = z.shape
    H = params["w_hh"].shape[0]
    O = params["w_lin"].shape[1]
    nz_pad = ((Nz + 7) // 8) * 8

    # ---- Host-side packing: 4 input DMAs instead of 8 ----------------------
    z_tm = jnp.transpose(z, (1, 0, 2)).reshape(T * B, Nz)       # time-major 2D
    state = jnp.concatenate([h0, c0], axis=0)                   # (2B, H)
    w_ih_pad = jnp.zeros((nz_pad, 4 * H), jnp.float32).at[:Nz].set(params["w_ih"])
    w_lstm = jnp.concatenate([w_ih_pad, params["w_hh"], params["b"]], axis=0)
    w_out = jnp.concatenate([params["w_lin"], params["b_lin"]], axis=0)

    # ---- Advisory cost hint for the XLA scheduler ---------------------------
    flops = 2 * B * T * (Nz + H) * 4 * H + 2 * B * T * H * O
    transcendentals = T * B * (2 * 4 * H + H) + B * T * O
    bytes_accessed = 4 * (z_tm.size + state.size + w_lstm.size
                          + w_out.size + T * B * O)

    kernel = partial(rgan_kernel, B=B, T=T, Nz=Nz, H=H, O=O,
                     apply_sigmoid=apply_sigmoid)
    vmem = lambda: pl.BlockSpec(memory_space=pltpu.MemorySpace.VMEM)

    y_tm = pl.pallas_call(
        kernel,
        out_shape=jax.ShapeDtypeStruct((T * B, O), jnp.float32),
        in_specs=[vmem() for _ in range(4)],     # whole arrays resident in VMEM
        out_specs=vmem(),
        cost_estimate=pl.CostEstimate(flops=flops,
                                      transcendentals=transcendentals,
                                      bytes_accessed=bytes_accessed),
    )(z_tm, state, w_lstm, w_out)

    # Tiny XLA-side relayout back to batch-first (B, T, O).
    return jnp.transpose(y_tm.reshape(T, B, O), (1, 0, 2))


def ref_forward(z, h0, c0, params, apply_sigmoid=True):
    """Pure-JAX reference (same math) for a correctness check."""
    def step(carry, x_t):
        h, c = carry
        gates = x_t @ params["w_ih"] + h @ params["w_hh"] + params["b"][0]
        i, f, g, o = jnp.split(gates, 4, axis=-1)
        i = jax.nn.sigmoid(i)
        f = jax.nn.sigmoid(f)
        g = jnp.tanh(g)
        o = jax.nn.sigmoid(o)
        c = f * c + i * g
        h = o * jnp.tanh(c)
        return (h, c), h

    z_tm = jnp.transpose(z, (1, 0, 2))
    _, hs = jax.lax.scan(step, (h0, c0), z_tm)
    y = hs @ params["w_lin"] + params["b_lin"][0]
    if apply_sigmoid:
        y = jax.nn.sigmoid(y)
    return jnp.transpose(y, (1, 0, 2))


def init_params(key, noise_size, hidden_size, output_size):
    """Deterministic parameter init (PyTorch-style uniform(-1/sqrt(H), 1/sqrt(H)))."""
    ks = jax.random.split(key, 6)
    bound = 1.0 / math.sqrt(hidden_size)
    u = lambda k, shape: jax.random.uniform(k, shape, jnp.float32, -bound, bound)
    # Stored already transposed for x @ W layout; gate columns ordered [i, f, g, o].
    w_ih = u(ks[0], (noise_size, 4 * hidden_size))
    w_hh = u(ks[1], (hidden_size, 4 * hidden_size))
    b = u(ks[2], (1, 4 * hidden_size)) + u(ks[3], (1, 4 * hidden_size))  # b_ih + b_hh
    w_lin = u(ks[4], (hidden_size, output_size))
    b_lin = u(ks[5], (1, output_size))
    return {"w_ih": w_ih, "w_hh": w_hh, "b": b, "w_lin": w_lin, "b_lin": b_lin}


if __name__ == "__main__":
    # Small shapes consistent with the module: batch=2, seq=8, noise=5,
    # hidden=32, output=4, num_layers=1.
    B, T = 2, 8
    noise_size, hidden_size, output_size = 5, 32, 4

    key = jax.random.PRNGKey(0)
    k_z, k_h, k_c, k_p = jax.random.split(key, 4)

    z = jax.random.normal(k_z, (B, T, noise_size), jnp.float32)
    # torch.randn initial states -> deterministic normal draws here.
    h0 = jax.random.normal(k_h, (B, hidden_size), jnp.float32)
    c0 = jax.random.normal(k_c, (B, hidden_size), jnp.float32)

    params = init_params(k_p, noise_size, hidden_size, output_size)

    y = rgan_generator_forward(z, h0, c0, params, apply_sigmoid=True)
    y = jax.block_until_ready(y)

    y_ref = jax.block_until_ready(ref_forward(z, h0, c0, params, apply_sigmoid=True))
    assert y.shape == (B, T, output_size)
    assert jnp.allclose(y, y_ref, atol=1e-5, rtol=1e-5), "mismatch vs JAX reference"

    print("KERNEL_OK")
</pallas_src>

<mosaic_0001>
module attributes {stable_mosaic.version = 11 : i64} {
  func.func @rgan_kernel(%arg0: memref<16x5xf32, #tpu.memory_space<vmem>>, %arg1: memref<4x32xf32, #tpu.memory_space<vmem>>, %arg2: memref<41x128xf32, #tpu.memory_space<vmem>>, %arg3: memref<33x4xf32, #tpu.memory_space<vmem>>, %arg4: memref<16x4xf32, #tpu.memory_space<vmem>>) attributes {dimension_semantics = [], scalar_prefetch = 0 : i64, scratch_operands = 0 : i64, tpu.core_type = #tpu.core_type<tc>} {
    %c0 = arith.constant 0 : index
    %c0_0 = arith.constant 0 : index
    %0 = vector.load %arg2[%c0, %c0_0] : memref<41x128xf32, #tpu.memory_space<vmem>>, vector<5x128xf32>
    %c8 = arith.constant 8 : index
    %c0_1 = arith.constant 0 : index
    %1 = vector.load %arg2[%c8, %c0_1] : memref<41x128xf32, #tpu.memory_space<vmem>>, vector<32x128xf32>
    %c40 = arith.constant 40 : index
    %c0_2 = arith.constant 0 : index
    %2 = vector.load %arg2[%c40, %c0_2] : memref<41x128xf32, #tpu.memory_space<vmem>>, vector<1x128xf32>
    %c0_3 = arith.constant 0 : index
    %c0_4 = arith.constant 0 : index
    %3 = vector.load %arg3[%c0_3, %c0_4] : memref<33x4xf32, #tpu.memory_space<vmem>>, vector<32x4xf32>
    %c32 = arith.constant 32 : index
    %c0_5 = arith.constant 0 : index
    %4 = vector.load %arg3[%c32, %c0_5] : memref<33x4xf32, #tpu.memory_space<vmem>>, vector<1x4xf32>
    %c0_6 = arith.constant 0 : index
    %c0_7 = arith.constant 0 : index
    %5 = vector.load %arg1[%c0_6, %c0_7] : memref<4x32xf32, #tpu.memory_space<vmem>>, vector<2x32xf32>
    %c2 = arith.constant 2 : index
    %c0_8 = arith.constant 0 : index
    %6 = vector.load %arg1[%c2, %c0_8] : memref<4x32xf32, #tpu.memory_space<vmem>>, vector<2x32xf32>
    %c0_9 = arith.constant 0 : index
    %c0_10 = arith.constant 0 : index
    %7 = vector.load %arg0[%c0_9, %c0_10] : memref<16x5xf32, #tpu.memory_space<vmem>>, vector<16x5xf32>
    %cst = arith.constant dense<0.000000e+00> : vector<16x128xf32>
    %8 = tpu.matmul %7, %0, %cst {dimension_numbers = #tpu.dot_dimension_numbers<[1], [0], [0], [1], [0, 0, 1, 1], [], []>} : vector<16x5xf32>, vector<5x128xf32>, vector<16x128xf32> -> vector<16x128xf32>
    %9 = vector.broadcast %2 : vector<1x128xf32> to vector<16x128xf32>
    %10 = arith.addf %8, %9 : vector<16x128xf32>
    %cst_11 = arith.constant dense<0.000000e+00> : vector<2x128xf32>
    %11 = tpu.matmul %5, %1, %cst_11 {dimension_numbers = #tpu.dot_dimension_numbers<[1], [0], [0], [1], [0, 0, 1, 1], [], []>} : vector<2x32xf32>, vector<32x128xf32>, vector<2x128xf32> -> vector<2x128xf32>
    %12 = vector.extract_strided_slice %10 {offsets = [0, 0], sizes = [2, 128], strides = [1, 1]} : vector<16x128xf32> to vector<2x128xf32>
    %13 = arith.addf %11, %12 : vector<2x128xf32>
    %14 = arith.negf %13 : vector<2x128xf32>
    %15 = math.exp %14 : vector<2x128xf32>
    %cst_12 = arith.constant 1.000000e+00 : f32
    %16 = vector.broadcast %cst_12 : f32 to vector<2x128xf32>
    %17 = arith.addf %16, %15 : vector<2x128xf32>
    %18 = arith.divf %16, %17 : vector<2x128xf32>
    %19 = math.tanh %13 : vector<2x128xf32>
    %20 = vector.extract_strided_slice %18 {offsets = [0, 0], sizes = [2, 32], strides = [1, 1]} : vector<2x128xf32> to vector<2x32xf32>
    %21 = vector.extract_strided_slice %18 {offsets = [0, 32], sizes = [2, 32], strides = [1, 1]} : vector<2x128xf32> to vector<2x32xf32>
    %22 = vector.extract_strided_slice %19 {offsets = [0, 64], sizes = [2, 32], strides = [1, 1]} : vector<2x128xf32> to vector<2x32xf32>
    %23 = vector.extract_strided_slice %18 {offsets = [0, 96], sizes = [2, 32], strides = [1, 1]} : vector<2x128xf32> to vector<2x32xf32>
    %24 = arith.mulf %21, %6 : vector<2x32xf32>
    %25 = arith.mulf %20, %22 : vector<2x32xf32>
    %26 = arith.addf %24, %25 : vector<2x32xf32>
    %27 = math.tanh %26 : vector<2x32xf32>
    %28 = arith.mulf %23, %27 : vector<2x32xf32>
    %cst_13 = arith.constant dense<0.000000e+00> : vector<2x128xf32>
    %29 = tpu.matmul %28, %1, %cst_13 {dimension_numbers = #tpu.dot_dimension_numbers<[1], [0], [0], [1], [0, 0, 1, 1], [], []>} : vector<2x32xf32>, vector<32x128xf32>, vector<2x128xf32> -> vector<2x128xf32>
    %30 = vector.extract_strided_slice %10 {offsets = [2, 0], sizes = [2, 128], strides = [1, 1]} : vector<16x128xf32> to vector<2x128xf32>
    %31 = arith.addf %29, %30 : vector<2x128xf32>
    %32 = arith.negf %31 : vector<2x128xf32>
    %33 = math.exp %32 : vector<2x128xf32>
    %cst_14 = arith.constant 1.000000e+00 : f32
    %34 = vector.broadcast %cst_14 : f32 to vector<2x128xf32>
    %35 = arith.addf %34, %33 : vector<2x128xf32>
    %36 = arith.divf %34, %35 : vector<2x128xf32>
    %37 = math.tanh %31 : vector<2x128xf32>
    %38 = vector.extract_strided_slice %36 {offsets = [0, 0], sizes = [2, 32], strides = [1, 1]} : vector<2x128xf32> to vector<2x32xf32>
    %39 = vector.extract_strided_slice %36 {offsets = [0, 32], sizes = [2, 32], strides = [1, 1]} : vector<2x128xf32> to vector<2x32xf32>
    %40 = vector.extract_strided_slice %37 {offsets = [0, 64], sizes = [2, 32], strides = [1, 1]} : vector<2x128xf32> to vector<2x32xf32>
    %41 = vector.extract_strided_slice %36 {offsets = [0, 96], sizes = [2, 32], strides = [1, 1]} : vector<2x128xf32> to vector<2x32xf32>
    %42 = arith.mulf %39, %26 : vector<2x32xf32>
    %43 = arith.mulf %38, %40 : vector<2x32xf32>
    %44 = arith.addf %42, %43 : vector<2x32xf32>
    %45 = math.tanh %44 : vector<2x32xf32>
    %46 = arith.mulf %41, %45 : vector<2x32xf32>
    %cst_15 = arith.constant dense<0.000000e+00> : vector<2x128xf32>
    %47 = tpu.matmul %46, %1, %cst_15 {dimension_numbers = #tpu.dot_dimension_numbers<[1], [0], [0], [1], [0, 0, 1, 1], [], []>} : vector<2x32xf32>, vector<32x128xf32>, vector<2x128xf32> -> vector<2x128xf32>
    %48 = vector.extract_strided_slice %10 {offsets = [4, 0], sizes = [2, 128], strides = [1, 1]} : vector<16x128xf32> to vector<2x128xf32>
    %49 = arith.addf %47, %48 : vector<2x128xf32>
    %50 = arith.negf %49 : vector<2x128xf32>
    %51 = math.exp %50 : vector<2x128xf32>
    %cst_16 = arith.constant 1.000000e+00 : f32
    %52 = vector.broadcast %cst_16 : f32 to vector<2x128xf32>
    %53 = arith.addf %52, %51 : vector<2x128xf32>
    %54 = arith.divf %52, %53 : vector<2x128xf32>
    %55 = math.tanh %49 : vector<2x128xf32>
    %56 = vector.extract_strided_slice %54 {offsets = [0, 0], sizes = [2, 32], strides = [1, 1]} : vector<2x128xf32> to vector<2x32xf32>
    %57 = vector.extract_strided_slice %54 {offsets = [0, 32], sizes = [2, 32], strides = [1, 1]} : vector<2x128xf32> to vector<2x32xf32>
    %58 = vector.extract_strided_slice %55 {offsets = [0, 64], sizes = [2, 32], strides = [1, 1]} : vector<2x128xf32> to vector<2x32xf32>
    %59 = vector.extract_strided_slice %54 {offsets = [0, 96], sizes = [2, 32], strides = [1, 1]} : vector<2x128xf32> to vector<2x32xf32>
    %60 = arith.mulf %57, %44 : vector<2x32xf32>
    %61 = arith.mulf %56, %58 : vector<2x32xf32>
    %62 = arith.addf %60, %61 : vector<2x32xf32>
    %63 = math.tanh %62 : vector<2x32xf32>
    %64 = arith.mulf %59, %63 : vector<2x32xf32>
    %cst_17 = arith.constant dense<0.000000e+00> : vector<2x128xf32>
    %65 = tpu.matmul %64, %1, %cst_17 {dimension_numbers = #tpu.dot_dimension_numbers<[1], [0], [0], [1], [0, 0, 1, 1], [], []>} : vector<2x32xf32>, vector<32x128xf32>, vector<2x128xf32> -> vector<2x128xf32>
    %66 = vector.extract_strided_slice %10 {offsets = [6, 0], sizes = [2, 128], strides = [1, 1]} : vector<16x128xf32> to vector<2x128xf32>
    %67 = arith.addf %65, %66 : vector<2x128xf32>
    %68 = arith.negf %67 : vector<2x128xf32>
    %69 = math.exp %68 : vector<2x128xf32>
    %cst_18 = arith.constant 1.000000e+00 : f32
    %70 = vector.broadcast %cst_18 : f32 to vector<2x128xf32>
    %71 = arith.addf %70, %69 : vector<2x128xf32>
    %72 = arith.divf %70, %71 : vector<2x128xf32>
    %73 = math.tanh %67 : vector<2x128xf32>
    %74 = vector.extract_strided_slice %72 {offsets = [0, 0], sizes = [2, 32], strides = [1, 1]} : vector<2x128xf32> to vector<2x32xf32>
    %75 = vector.extract_strided_slice %72 {offsets = [0, 32], sizes = [2, 32], strides = [1, 1]} : vector<2x128xf32> to vector<2x32xf32>
    %76 = vector.extract_strided_slice %73 {offsets = [0, 64], sizes = [2, 32], strides = [1, 1]} : vector<2x128xf32> to vector<2x32xf32>
    %77 = vector.extract_strided_slice %72 {offsets = [0, 96], sizes = [2, 32], strides = [1, 1]} : vector<2x128xf32> to vector<2x32xf32>
    %78 = arith.mulf %75, %62 : vector<2x32xf32>
    %79 = arith.mulf %74, %76 : vector<2x32xf32>
    %80 = arith.addf %78, %79 : vector<2x32xf32>
    %81 = math.tanh %80 : vector<2x32xf32>
    %82 = arith.mulf %77, %81 : vector<2x32xf32>
    %cst_19 = arith.constant dense<0.000000e+00> : vector<2x128xf32>
    %83 = tpu.matmul %82, %1, %cst_19 {dimension_numbers = #tpu.dot_dimension_numbers<[1], [0], [0], [1], [0, 0, 1, 1], [], []>} : vector<2x32xf32>, vector<32x128xf32>, vector<2x128xf32> -> vector<2x128xf32>
    %84 = vector.extract_strided_slice %10 {offsets = [8, 0], sizes = [2, 128], strides = [1, 1]} : vector<16x128xf32> to vector<2x128xf32>
    %85 = arith.addf %83, %84 : vector<2x128xf32>
    %86 = arith.negf %85 : vector<2x128xf32>
    %87 = math.exp %86 : vector<2x128xf32>
    %cst_20 = arith.constant 1.000000e+00 : f32
    %88 = vector.broadcast %cst_20 : f32 to vector<2x128xf32>
    %89 = arith.addf %88, %87 : vector<2x128xf32>
    %90 = arith.divf %88, %89 : vector<2x128xf32>
    %91 = math.tanh %85 : vector<2x128xf32>
    %92 = vector.extract_strided_slice %90 {offsets = [0, 0], sizes = [2, 32], strides = [1, 1]} : vector<2x128xf32> to vector<2x32xf32>
    %93 = vector.extract_strided_slice %90 {offsets = [0, 32], sizes = [2, 32], strides = [1, 1]} : vector<2x128xf32> to vector<2x32xf32>
    %94 = vector.extract_strided_slice %91 {offsets = [0, 64], sizes = [2, 32], strides = [1, 1]} : vector<2x128xf32> to vector<2x32xf32>
    %95 = vector.extract_strided_slice %90 {offsets = [0, 96], sizes = [2, 32], strides = [1, 1]} : vector<2x128xf32> to vector<2x32xf32>
    %96 = arith.mulf %93, %80 : vector<2x32xf32>
    %97 = arith.mulf %92, %94 : vector<2x32xf32>
    %98 = arith.addf %96, %97 : vector<2x32xf32>
    %99 = math.tanh %98 : vector<2x32xf32>
    %100 = arith.mulf %95, %99 : vector<2x32xf32>
    %cst_21 = arith.constant dense<0.000000e+00> : vector<2x128xf32>
    %101 = tpu.matmul %100, %1, %cst_21 {dimension_numbers = #tpu.dot_dimension_numbers<[1], [0], [0], [1], [0, 0, 1, 1], [], []>} : vector<2x32xf32>, vector<32x128xf32>, vector<2x128xf32> -> vector<2x128xf32>
    %102 = vector.extract_strided_slice %10 {offsets = [10, 0], sizes = [2, 128], strides = [1, 1]} : vector<16x128xf32> to vector<2x128xf32>
    %103 = arith.addf %101, %102 : vector<2x128xf32>
    %104 = arith.negf %103 : vector<2x128xf32>
    %105 = math.exp %104 : vector<2x128xf32>
    %cst_22 = arith.constant 1.000000e+00 : f32
    %106 = vector.broadcast %cst_22 : f32 to vector<2x128xf32>
    %107 = arith.addf %106, %105 : vector<2x128xf32>
    %108 = arith.divf %106, %107 : vector<2x128xf32>
    %109 = math.tanh %103 : vector<2x128xf32>
    %110 = vector.extract_strided_slice %108 {offsets = [0, 0], sizes = [2, 32], strides = [1, 1]} : vector<2x128xf32> to vector<2x32xf32>
    %111 = vector.extract_strided_slice %108 {offsets = [0, 32], sizes = [2, 32], strides = [1, 1]} : vector<2x128xf32> to vector<2x32xf32>
    %112 = vector.extract_strided_slice %109 {offsets = [0, 64], sizes = [2, 32], strides = [1, 1]} : vector<2x128xf32> to vector<2x32xf32>
    %113 = vector.extract_strided_slice %108 {offsets = [0, 96], sizes = [2, 32], strides = [1, 1]} : vector<2x128xf32> to vector<2x32xf32>
    %114 = arith.mulf %111, %98 : vector<2x32xf32>
    %115 = arith.mulf %110, %112 : vector<2x32xf32>
    %116 = arith.addf %114, %115 : vector<2x32xf32>
    %117 = math.tanh %116 : vector<2x32xf32>
    %118 = arith.mulf %113, %117 : vector<2x32xf32>
    %cst_23 = arith.constant dense<0.000000e+00> : vector<2x128xf32>
    %119 = tpu.matmul %118, %1, %cst_23 {dimension_numbers = #tpu.dot_dimension_numbers<[1], [0], [0], [1], [0, 0, 1, 1], [], []>} : vector<2x32xf32>, vector<32x128xf32>, vector<2x128xf32> -> vector<2x128xf32>
    %120 = vector.extract_strided_slice %10 {offsets = [12, 0], sizes = [2, 128], strides = [1, 1]} : vector<16x128xf32> to vector<2x128xf32>
    %121 = arith.addf %119, %120 : vector<2x128xf32>
    %122 = arith.negf %121 : vector<2x128xf32>
    %123 = math.exp %122 : vector<2x128xf32>
    %cst_24 = arith.constant 1.000000e+00 : f32
    %124 = vector.broadcast %cst_24 : f32 to vector<2x128xf32>
    %125 = arith.addf %124, %123 : vector<2x128xf32>
    %126 = arith.divf %124, %125 : vector<2x128xf32>
    %127 = math.tanh %121 : vector<2x128xf32>
    %128 = vector.extract_strided_slice %126 {offsets = [0, 0], sizes = [2, 32], strides = [1, 1]} : vector<2x128xf32> to vector<2x32xf32>
    %129 = vector.extract_strided_slice %126 {offsets = [0, 32], sizes = [2, 32], strides = [1, 1]} : vector<2x128xf32> to vector<2x32xf32>
    %130 = vector.extract_strided_slice %127 {offsets = [0, 64], sizes = [2, 32], strides = [1, 1]} : vector<2x128xf32> to vector<2x32xf32>
    %131 = vector.extract_strided_slice %126 {offsets = [0, 96], sizes = [2, 32], strides = [1, 1]} : vector<2x128xf32> to vector<2x32xf32>
    %132 = arith.mulf %129, %116 : vector<2x32xf32>
    %133 = arith.mulf %128, %130 : vector<2x32xf32>
    %134 = arith.addf %132, %133 : vector<2x32xf32>
    %135 = math.tanh %134 : vector<2x32xf32>
    %136 = arith.mulf %131, %135 : vector<2x32xf32>
    %cst_25 = arith.constant dense<0.000000e+00> : vector<2x128xf32>
    %137 = tpu.matmul %136, %1, %cst_25 {dimension_numbers = #tpu.dot_dimension_numbers<[1], [0], [0], [1], [0, 0, 1, 1], [], []>} : vector<2x32xf32>, vector<32x128xf32>, vector<2x128xf32> -> vector<2x128xf32>
    %138 = vector.extract_strided_slice %10 {offsets = [14, 0], sizes = [2, 128], strides = [1, 1]} : vector<16x128xf32> to vector<2x128xf32>
    %139 = arith.addf %137, %138 : vector<2x128xf32>
    %140 = arith.negf %139 : vector<2x128xf32>
    %141 = math.exp %140 : vector<2x128xf32>
    %cst_26 = arith.constant 1.000000e+00 : f32
    %142 = vector.broadcast %cst_26 : f32 to vector<2x128xf32>
    %143 = arith.addf %142, %141 : vector<2x128xf32>
    %144 = arith.divf %142, %143 : vector<2x128xf32>
    %145 = math.tanh %139 : vector<2x128xf32>
    %146 = vector.extract_strided_slice %144 {offsets = [0, 0], sizes = [2, 32], strides = [1, 1]} : vector<2x128xf32> to vector<2x32xf32>
    %147 = vector.extract_strided_slice %144 {offsets = [0, 32], sizes = [2, 32], strides = [1, 1]} : vector<2x128xf32> to vector<2x32xf32>
    %148 = vector.extract_strided_slice %145 {offsets = [0, 64], sizes = [2, 32], strides = [1, 1]} : vector<2x128xf32> to vector<2x32xf32>
    %149 = vector.extract_strided_slice %144 {offsets = [0, 96], sizes = [2, 32], strides = [1, 1]} : vector<2x128xf32> to vector<2x32xf32>
    %150 = arith.mulf %147, %134 : vector<2x32xf32>
    %151 = arith.mulf %146, %148 : vector<2x32xf32>
    %152 = arith.addf %150, %151 : vector<2x32xf32>
    %153 = math.tanh %152 : vector<2x32xf32>
    %154 = arith.mulf %149, %153 : vector<2x32xf32>
    %155 = tpu.concatenate %28, %46, %64, %82, %100, %118, %136, %154 in 0 : vector<2x32xf32>, vector<2x32xf32>, vector<2x32xf32>, vector<2x32xf32>, vector<2x32xf32>, vector<2x32xf32>, vector<2x32xf32>, vector<2x32xf32> -> vector<16x32xf32>
    %cst_27 = arith.constant dense<0.000000e+00> : vector<16x4xf32>
    %156 = tpu.matmul %155, %3, %cst_27 {dimension_numbers = #tpu.dot_dimension_numbers<[1], [0], [0], [1], [0, 0, 1, 1], [], []>} : vector<16x32xf32>, vector<32x4xf32>, vector<16x4xf32> -> vector<16x4xf32>
    %157 = vector.broadcast %4 : vector<1x4xf32> to vector<16x4xf32>
    %158 = arith.addf %156, %157 : vector<16x4xf32>
    %159 = arith.negf %158 : vector<16x4xf32>
    %160 = math.exp %159 : vector<16x4xf32>
    %cst_28 = arith.constant 1.000000e+00 : f32
    %161 = vector.broadcast %cst_28 : f32 to vector<16x4xf32>
    %162 = arith.addf %161, %160 : vector<16x4xf32>
    %163 = arith.divf %161, %162 : vector<16x4xf32>
    %c0_29 = arith.constant 0 : index
    %c0_30 = arith.constant 0 : index
    %164 = vector.load %arg4[%c0_29, %c0_30] : memref<16x4xf32, #tpu.memory_space<vmem>>, vector<16x4xf32>
    tpu.vector_store %arg4[%c0_29, %c0_30], %163 {strides = array<i32>} : memref<16x4xf32, #tpu.memory_space<vmem>>, vector<16x4xf32>,
    return
  }
}

</mosaic_0001>

<llo_original>
// kernel: tpu_custom_call.1
$region0: #{tpu_custom_call.1}
  #allocation0 [shape = 'u32[]', space=smem, size = 0x4, offset = 0x4, fixed_abs, tag = 'smem constant byte address 0x4 - core index']
  #allocation1 [shape = 'u32[144,128]{1,0:T(1,128)}', space=vmem, size = 0x12000, scoped, tag = 'internal scratch']
  %s0 = inlined_call_operand.vmem [shape: f32[16,5], index: 0, kind: input, shape index: {}]
  %s1 = inlined_call_operand.vmem [shape: f32[4,32], index: 1, kind: input, shape index: {}]
  %s2 = inlined_call_operand.vmem [shape: f32[41,128], index: 2, kind: input, shape index: {}]
  %s3 = inlined_call_operand.vmem [shape: f32[33,4], index: 3, kind: input, shape index: {}]
  %s4 = inlined_call_operand.vmem [shape: f32[16,4], index: 4, kind: output, shape index: {}]
  %s5 = sld [smem:[#allocation0]]
  $region26: #{tpu_custom_call.1} parent=0
    _
  %s7 = ssub.s32 1, %s5
  %s8 = scalar_select 0, %s7, %s5
  // Predicated region
  $region2: #{tpu_custom_call.1} parent=0 // pred_check
    _
  $region3: #{tpu_custom_call.1} parent=0 // pred_check_branch
    %10 = sbr.rel (0) target = $region5
  $region4: #{tpu_custom_call.1} parent=0 // pred_region
    _
  $region5: #{tpu_custom_call.1} parent=0 // pred_fallthru
    _
  // Predicated region
  $region6: #{tpu_custom_call.1} parent=0 // pred_check
    _
  $region7: #{tpu_custom_call.1} parent=0 // pred_check_branch
    %12 = sbr.rel (0) target = $region9
  $region8: #{tpu_custom_call.1} parent=0 // pred_region
    _
  $region9: #{tpu_custom_call.1} parent=0 // pred_fallthru
    _
  // Predicated region
  $region10: #{tpu_custom_call.1} parent=0 // pred_check
    _
  $region11: #{tpu_custom_call.1} parent=0 // pred_check_branch
    %14 = sbr.rel (0) target = $region13
  $region12: #{tpu_custom_call.1} parent=0 // pred_region
    _
  $region13: #{tpu_custom_call.1} parent=0 // pred_fallthru
    _
  // Predicated region
  $region14: #{tpu_custom_call.1} parent=0 // pred_check
    _
  $region15: #{tpu_custom_call.1} parent=0 // pred_check_branch
    %16 = sbr.rel (0) target = $region17
  $region16: #{tpu_custom_call.1} parent=0 // pred_region
    _
  $region17: #{tpu_custom_call.1} parent=0 // pred_fallthru
    _
  %v17 = vld [vmem:[%s2] sm:$0x1f]
  %v18 = vld [vmem:[%s2 + $0x8] sm:$0xff]
  %v19 = vld [vmem:[%s2 + $0x10] sm:$0xff]
  %v20 = vld [vmem:[%s2 + $0x18] sm:$0xff]
  %v21 = vld [vmem:[%s2 + $0x20] sm:$0xff]
  %v22 = vld [vmem:[%s2 + $0x28] sm:$0x1]
  %v23 = vld [vmem:[%s3] sm:$0xff]
  %v24 = vld [vmem:[%s3 + $0x8] sm:$0xff]
  %v25 = vld [vmem:[%s3 + $0x10] sm:$0xff]
  %v26 = vld [vmem:[%s3 + $0x18] sm:$0xff]
  %v27 = vld [vmem:[%s3 + $0x20] sm:$0x1]
  %v28 = vld [vmem:[%s1] sm:$0x3]
  %v29 = vld [vmem:[%s1 + $0x2] sm:$0x3]
  %v30 = vld [vmem:[%s0] sm:$0xff]
  %v31 = vld [vmem:[%s0 + $0x8] sm:$0xff]
  %v32 = vlaneseq
  %v33 = vshrl.u32 %v32, 7
  %v34 = vsub.s32 0, %v33
  %v35 = vrot.slane %v22, %v34
  %vm36 = vcmask 39936
  %v38 = vsel %vm36, %v30, 0
  %v41 = vsel %vm36, %v31, 0
  %vm43 = vcmask 1044480
  %v45 = vsel %vm43, %v17, 0
  %47 = vmatprep.subr.mxu0 0.0
  %48 = vmatpush1.msra.mxu0 0.0
  %49 = vmatprep.subr.mxu0 0.0
  %50 = vmatpush1.msra.mxu0 0.0
  %51 = vmatprep.subr.mxu0 0.0
  %52 = vmatpush1.msra.mxu0 0.0
  %53 = vmatprep.subr.mxu0 0.0
  %54 = vmatpush1.msra.mxu0 0.0
  %55 = vmatprep.subr.mxu0 0.0
  %56 = vmatpush1.msra.mxu0 0.0
  %57 = vmatprep.subr.mxu0 0.0
  %58 = vmatpush1.msra.mxu0 0.0
  %59 = vmatprep.subr.mxu0 0.0
  %60 = vmatpush1.msra.mxu0 0.0
  %61 = vmatprep.subr.mxu0 0.0
  %62 = vmatpush1.msra.mxu0 0.0
  %63 = vmatprep.subr.mxu0 0.0
  %64 = vmatpush1.msra.mxu0 0.0
  %65 = vmatprep.subr.mxu0 0.0
  %66 = vmatpush1.msra.mxu0 0.0
  %67 = vmatprep.subr.mxu0 0.0
  %68 = vmatpush1.msra.mxu0 0.0
  %69 = vmatprep.subr.mxu0 0.0
  %70 = vmatpush1.msra.mxu0 0.0
  %71 = vmatprep.subr.mxu0 0.0
  %72 = vmatpush1.msra.mxu0 0.0
  %73 = vmatprep.subr.mxu0 0.0
  %74 = vmatpush1.msra.mxu0 0.0
  %75 = vmatprep.subr.mxu0 0.0
  %76 = vmatpush1.msra.mxu0 0.0
  %77 = vmatprep.subr.mxu0 0.0
  %78 = vmatpush1.msra.mxu0 %v45
  %79 = vmatprep.subr.mxu0 0.0
  %80 = vmatpush2.msra.mxu0 0.0
  %81 = vmatprep.subr.mxu0 0.0
  %82 = vmatpush2.msra.mxu0 0.0
  %83 = vmatprep.subr.mxu0 0.0
  %84 = vmatpush2.msra.mxu0 0.0
  %85 = vmatprep.subr.mxu0 0.0
  %86 = vmatpush2.msra.mxu0 0.0
  %87 = vmatprep.subr.mxu0 0.0
  %88 = vmatpush2.msra.mxu0 0.0
  %89 = vmatprep.subr.mxu0 0.0
  %90 = vmatpush2.msra.mxu0 0.0
  %91 = vmatprep.subr.mxu0 0.0
  %92 = vmatpush2.msra.mxu0 0.0
  %93 = vmatprep.subr.mxu0 0.0
  %94 = vmatpush2.msra.mxu0 0.0
  %95 = vmatprep.subr.mxu0 0.0
  %96 = vmatpush2.msra.mxu0 0.0
  %97 = vmatprep.subr.mxu0 0.0
  %98 = vmatpush2.msra.mxu0 0.0
  %99 = vmatprep.subr.mxu0 0.0
  %100 = vmatpush2.msra.mxu0 0.0
  %101 = vmatprep.subr.mxu0 0.0
  %102 = vmatpush2.msra.mxu0 0.0
  %103 = vmatprep.subr.mxu0 0.0
  %104 = vmatpush2.msra.mxu0 0.0
  %105 = vmatprep.subr.mxu0 0.0
  %106 = vmatpush2.msra.mxu0 0.0
  %107 = vmatprep.subr.mxu0 0.0
  %108 = vmatpush2.msra.mxu0 0.0
  %109 = vmatprep.subr.mxu0 0.0
  %110 = vmatpush2.msra.mxu0 0.0
  %111 = vmatprep.mubr.f32.mxu0 0.0
  %112 = vmatmul.mubr.f32.gmra.mxu0 %v38
  %v113 = vpop.f32.mrf.mxu0
  %v114 = vadd.f32 %v35, %v113
  %v115 = vpop.f32.mrf.mxu0
  %116 = vmatprep.mubr.f32.mxu0 0.0
  %117 = vmatmul.mubr.f32.gmra.mxu0 %v41
  %v118 = vpop.f32.mrf.mxu0
  %v119 = vadd.f32 %v35, %v118
  %v120 = vpop.f32.mrf.mxu0
  %121 = vdwg.mxu0
  %vm122 = vcmask 261120
  %v124 = vsel %vm122, %v28, 0
  %126 = vmatprep.subr.mxu0 0.0
  %127 = vmatpush1.msra.mxu0 0.0
  %128 = vmatprep.subr.mxu0 0.0
  %129 = vmatpush1.msra.mxu0 0.0
  %130 = vmatprep.subr.mxu0 0.0
  %131 = vmatpush1.msra.mxu0 0.0
  %132 = vmatprep.subr.mxu0 0.0
  %133 = vmatpush1.msra.mxu0 0.0
  %134 = vmatprep.subr.mxu0 0.0
  %135 = vmatpush1.msra.mxu0 0.0
  %136 = vmatprep.subr.mxu0 0.0
  %137 = vmatpush1.msra.mxu0 0.0
  %138 = vmatprep.subr.mxu0 0.0
  %139 = vmatpush1.msra.mxu0 0.0
  %140 = vmatprep.subr.mxu0 0.0
  %141 = vmatpush1.msra.mxu0 0.0
  %142 = vmatprep.subr.mxu0 0.0
  %143 = vmatpush1.msra.mxu0 0.0
  %144 = vmatprep.subr.mxu0 0.0
  %145 = vmatpush1.msra.mxu0 0.0
  %146 = vmatprep.subr.mxu0 0.0
  %147 = vmatpush1.msra.mxu0 0.0
  %148 = vmatprep.subr.mxu0 0.0
  %149 = vmatpush1.msra.mxu0 0.0
  %150 = vmatprep.subr.mxu0 0.0
  %151 = vmatpush1.msra.mxu0 %v21
  %152 = vmatprep.subr.mxu0 0.0
  %153 = vmatpush1.msra.mxu0 %v20
  %154 = vmatprep.subr.mxu0 0.0
  %155 = vmatpush1.msra.mxu0 %v19
  %156 = vmatprep.subr.mxu0 0.0
  %157 = vmatpush1.msra.mxu0 %v18
  %158 = vmatprep.subr.mxu0 0.0
  %159 = vmatpush2.msra.mxu0 0.0
  %160 = vmatprep.subr.mxu0 0.0
  %161 = vmatpush2.msra.mxu0 0.0
  %162 = vmatprep.subr.mxu0 0.0
  %163 = vmatpush2.msra.mxu0 0.0
  %164 = vmatprep.subr.mxu0 0.0
  %165 = vmatpush2.msra.mxu0 0.0
  %166 = vmatprep.subr.mxu0 0.0
  %167 = vmatpush2.msra.mxu0 0.0
  %168 = vmatprep.subr.mxu0 0.0
  %169 = vmatpush2.msra.mxu0 0.0
  %170 = vmatprep.subr.mxu0 0.0
  %171 = vmatpush2.msra.mxu0 0.0
  %172 = vmatprep.subr.mxu0 0.0
  %173 = vmatpush2.msra.mxu0 0.0
  %174 = vmatprep.subr.mxu0 0.0
  %175 = vmatpush2.msra.mxu0 0.0
  %176 = vmatprep.subr.mxu0 0.0
  %177 = vmatpush2.msra.mxu0 0.0
  %178 = vmatprep.subr.mxu0 0.0
  %179 = vmatpush2.msra.mxu0 0.0
  %180 = vmatprep.subr.mxu0 0.0
  %181 = vmatpush2.msra.mxu0 0.0
  %182 = vmatprep.subr.mxu0 0.0
  %183 = vmatpush2.msra.mxu0 0.0
  %184 = vmatprep.subr.mxu0 0.0
  %185 = vmatpush2.msra.mxu0 0.0
  %186 = vmatprep.subr.mxu0 0.0
  %187 = vmatpush2.msra.mxu0 0.0
  %188 = vmatprep.subr.mxu0 0.0
  %189 = vmatpush2.msra.mxu0 0.0
  %190 = vmatprep.mubr.f32.mxu0 0.0
  %191 = vmatmul.mubr.f32.gmra.mxu0 %v124
  %v192 = vpop.f32.mrf.mxu0
  %v193 = vadd.f32 %v114, %v192
  %v194 = vpop.f32.mrf.mxu0
  %195 = vdwg.mxu0
  %v196 = vxor.u32 %v193, 2147483648
  %v197 = vmul.f32 %v196, 1.442695
  %v198 = vpow.pop %v197
  %v199 = vadd.f32 %v198, 1.0
  %v200 = vrcp.pop %v199
  %v201 = vmul.f32 1.0, %v200
  %v202 = vtanh.pop %v193
  %204 = vrot.lane.b32.xlu0 %v29, 32
  %v205 = vpop.permute.xlu0 %204
  %v207 = vmul.f32 %v201, %v205
  %209 = vrot.lane.b32.xlu0 %v202, 64
  %v210 = vpop.permute.xlu0 %209
  %v212 = vmul.f32 %v201, %v210
  %214 = vrot.lane.b32.xlu0 %v212, 32
  %v215 = vpop.permute.xlu0 %214
  %v217 = vadd.f32 %v207, %v215
  %v218 = vtanh.pop %v217
  %220 = vrot.lane.b32.xlu0 %v218, 64
  %v221 = vpop.permute.xlu0 %220
  %v223 = vmul.f32 %v201, %v221
  %225 = vrot.lane.b32.xlu0 %v223, 32
  %v226 = vpop.permute.xlu0 %225
  %v228 = vrot.slane %v114, 2
  %v230 = vsel %vm122, %v226, 0
  %232 = vmatprep.subr.mxu0 0.0
  %233 = vmatpush1.msra.mxu0 0.0
  %234 = vmatprep.subr.mxu0 0.0
  %235 = vmatpush1.msra.mxu0 0.0
  %236 = vmatprep.subr.mxu0 0.0
  %237 = vmatpush1.msra.mxu0 0.0
  %238 = vmatprep.subr.mxu0 0.0
  %239 = vmatpush1.msra.mxu0 0.0
  %240 = vmatprep.subr.mxu0 0.0
  %241 = vmatpush1.msra.mxu0 0.0
  %242 = vmatprep.subr.mxu0 0.0
  %243 = vmatpush1.msra.mxu0 0.0
  %244 = vmatprep.subr.mxu0 0.0
  %245 = vmatpush1.msra.mxu0 0.0
  %246 = vmatprep.subr.mxu0 0.0
  %247 = vmatpush1.msra.mxu0 0.0
  %248 = vmatprep.subr.mxu0 0.0
  %249 = vmatpush1.msra.mxu0 0.0
  %250 = vmatprep.subr.mxu0 0.0
  %251 = vmatpush1.msra.mxu0 0.0
  %252 = vmatprep.subr.mxu0 0.0
  %253 = vmatpush1.msra.mxu0 0.0
  %254 = vmatprep.subr.mxu0 0.0
  %255 = vmatpush1.msra.mxu0 0.0
  %256 = vmatprep.subr.mxu0 0.0
  %257 = vmatpush1.msra.mxu0 %v21
  %258 = vmatprep.subr.mxu0 0.0
  %259 = vmatpush1.msra.mxu0 %v20
  %260 = vmatprep.subr.mxu0 0.0
  %261 = vmatpush1.msra.mxu0 %v19
  %262 = vmatprep.subr.mxu0 0.0
  %263 = vmatpush1.msra.mxu0 %v18
  %264 = vmatprep.subr.mxu0 0.0
  %265 = vmatpush2.msra.mxu0 0.0
  %266 = vmatprep.subr.mxu0 0.0
  %267 = vmatpush2.msra.mxu0 0.0
  %268 = vmatprep.subr.mxu0 0.0
  %269 = vmatpush2.msra.mxu0 0.0
  %270 = vmatprep.subr.mxu0 0.0
  %271 = vmatpush2.msra.mxu0 0.0
  %272 = vmatprep.subr.mxu0 0.0
  %273 = vmatpush2.msra.mxu0 0.0
  %274 = vmatprep.subr.mxu0 0.0
  %275 = vmatpush2.msra.mxu0 0.0
  %276 = vmatprep.subr.mxu0 0.0
  %277 = vmatpush2.msra.mxu0 0.0
  %278 = vmatprep.subr.mxu0 0.0
  %279 = vmatpush2.msra.mxu0 0.0
  %280 = vmatprep.subr.mxu0 0.0
  %281 = vmatpush2.msra.mxu0 0.0
  %282 = vmatprep.subr.mxu0 0.0
  %283 = vmatpush2.msra.mxu0 0.0
  %284 = vmatprep.subr.mxu0 0.0
  %285 = vmatpush2.msra.mxu0 0.0
  %286 = vmatprep.subr.mxu0 0.0
  %287 = vmatpush2.msra.mxu0 0.0
  %288 = vmatprep.subr.mxu0 0.0
  %289 = vmatpush2.msra.mxu0 0.0
  %290 = vmatprep.subr.mxu0 0.0
  %291 = vmatpush2.msra.mxu0 0.0
  %292 = vmatprep.subr.mxu0 0.0
  %293 = vmatpush2.msra.mxu0 0.0
  %294 = vmatprep.subr.mxu0 0.0
  %295 = vmatpush2.msra.mxu0 0.0
  %296 = vmatprep.mubr.f32.mxu0 0.0
  %297 = vmatmul.mubr.f32.gmra.mxu0 %v230
  %v298 = vpop.f32.mrf.mxu0
  %v299 = vadd.f32 %v228, %v298
  %v300 = vpop.f32.mrf.mxu0
  %301 = vdwg.mxu0
  %v302 = vxor.u32 %v299, 2147483648
  %v303 = vmul.f32 %v302, 1.442695
  %v304 = vpow.pop %v303
  %v305 = vadd.f32 %v304, 1.0
  %v306 = vrcp.pop %v305
  %v307 = vmul.f32 1.0, %v306
  %v308 = vtanh.pop %v299
  %v309 = vmul.f32 %v307, %v217
  %311 = vrot.lane.b32.xlu0 %v308, 64
  %v312 = vpop.permute.xlu0 %311
  %v314 = vmul.f32 %v307, %v312
  %316 = vrot.lane.b32.xlu0 %v314, 32
  %v317 = vpop.permute.xlu0 %316
  %v319 = vadd.f32 %v309, %v317
  %v320 = vtanh.pop %v319
  %322 = vrot.lane.b32.xlu0 %v320, 64
  %v323 = vpop.permute.xlu0 %322
  %v325 = vmul.f32 %v307, %v323
  %327 = vrot.lane.b32.xlu0 %v325, 32
  %v328 = vpop.permute.xlu0 %327
  %v329 = vrot.slane %v114, 4
  %v331 = vsel %vm122, %v328, 0
  %333 = vmatprep.subr.mxu0 0.0
  %334 = vmatpush1.msra.mxu0 0.0
  %335 = vmatprep.subr.mxu0 0.0
  %336 = vmatpush1.msra.mxu0 0.0
  %337 = vmatprep.subr.mxu0 0.0
  %338 = vmatpush1.msra.mxu0 0.0
  %339 = vmatprep.subr.mxu0 0.0
  %340 = vmatpush1.msra.mxu0 0.0
  %341 = vmatprep.subr.mxu0 0.0
  %342 = vmatpush1.msra.mxu0 0.0
  %343 = vmatprep.subr.mxu0 0.0
  %344 = vmatpush1.msra.mxu0 0.0
  %345 = vmatprep.subr.mxu0 0.0
  %346 = vmatpush1.msra.mxu0 0.0
  %347 = vmatprep.subr.mxu0 0.0
  %348 = vmatpush1.msra.mxu0 0.0
  %349 = vmatprep.subr.mxu0 0.0
  %350 = vmatpush1.msra.mxu0 0.0
  %351 = vmatprep.subr.mxu0 0.0
  %352 = vmatpush1.msra.mxu0 0.0
  %353 = vmatprep.subr.mxu0 0.0
  %354 = vmatpush1.msra.mxu0 0.0
  %355 = vmatprep.subr.mxu0 0.0
  %356 = vmatpush1.msra.mxu0 0.0
  %357 = vmatprep.subr.mxu0 0.0
  %358 = vmatpush1.msra.mxu0 %v21
  %359 = vmatprep.subr.mxu0 0.0
  %360 = vmatpush1.msra.mxu0 %v20
  %361 = vmatprep.subr.mxu0 0.0
  %362 = vmatpush1.msra.mxu0 %v19
  %363 = vmatprep.subr.mxu0 0.0
  %364 = vmatpush1.msra.mxu0 %v18
  %365 = vmatprep.subr.mxu0 0.0
  %366 = vmatpush2.msra.mxu0 0.0
  %367 = vmatprep.subr.mxu0 0.0
  %368 = vmatpush2.msra.mxu0 0.0
  %369 = vmatprep.subr.mxu0 0.0
  %370 = vmatpush2.msra.mxu0 0.0
  %371 = vmatprep.subr.mxu0 0.0
  %372 = vmatpush2.msra.mxu0 0.0
  %373 = vmatprep.subr.mxu0 0.0
  %374 = vmatpush2.msra.mxu0 0.0
  %375 = vmatprep.subr.mxu0 0.0
  %376 = vmatpush2.msra.mxu0 0.0
  %377 = vmatprep.subr.mxu0 0.0
  %378 = vmatpush2.msra.mxu0 0.0
  %379 = vmatprep.subr.mxu0 0.0
  %380 = vmatpush2.msra.mxu0 0.0
  %381 = vmatprep.subr.mxu0 0.0
  %382 = vmatpush2.msra.mxu0 0.0
  %383 = vmatprep.subr.mxu0 0.0
  %384 = vmatpush2.msra.mxu0 0.0
  %385 = vmatprep.subr.mxu0 0.0
  %386 = vmatpush2.msra.mxu0 0.0
  %387 = vmatprep.subr.mxu0 0.0
  %388 = vmatpush2.msra.mxu0 0.0
  %389 = vmatprep.subr.mxu0 0.0
  %390 = vmatpush2.msra.mxu0 0.0
  %391 = vmatprep.subr.mxu0 0.0
  %392 = vmatpush2.msra.mxu0 0.0
  %393 = vmatprep.subr.mxu0 0.0
  %394 = vmatpush2.msra.mxu0 0.0
  %395 = vmatprep.subr.mxu0 0.0
  %396 = vmatpush2.msra.mxu0 0.0
  %397 = vmatprep.mubr.f32.mxu0 0.0
  %398 = vmatmul.mubr.f32.gmra.mxu0 %v331
  %v399 = vpop.f32.mrf.mxu0
  %v400 = vadd.f32 %v329, %v399
  %v401 = vpop.f32.mrf.mxu0
  %402 = vdwg.mxu0
  %v403 = vxor.u32 %v400, 2147483648
  %v404 = vmul.f32 %v403, 1.442695
  %v405 = vpow.pop %v404
  %v406 = vadd.f32 %v405, 1.0
  %v407 = vrcp.pop %v406
  %v408 = vmul.f32 1.0, %v407
  %v409 = vtanh.pop %v400
  %v410 = vmul.f32 %v408, %v319
  %412 = vrot.lane.b32.xlu0 %v409, 64
  %v413 = vpop.permute.xlu0 %412
  %v415 = vmul.f32 %v408, %v413
  %417 = vrot.lane.b32.xlu0 %v415, 32
  %v418 = vpop.permute.xlu0 %417
  %v420 = vadd.f32 %v410, %v418
  %v421 = vtanh.pop %v420
  %423 = vrot.lane.b32.xlu0 %v421, 64
  %v424 = vpop.permute.xlu0 %423
  %v426 = vmul.f32 %v408, %v424
  %428 = vrot.lane.b32.xlu0 %v426, 32
  %v429 = vpop.permute.xlu0 %428
  %v430 = vrot.slane %v114, 6
  %v432 = vsel %vm122, %v429, 0
  %434 = vmatprep.subr.mxu0 0.0
  %435 = vmatpush1.msra.mxu0 0.0
  %436 = vmatprep.subr.mxu0 0.0
  %437 = vmatpush1.msra.mxu0 0.0
  %438 = vmatprep.subr.mxu0 0.0
  %439 = vmatpush1.msra.mxu0 0.0
  %440 = vmatprep.subr.mxu0 0.0
  %441 = vmatpush1.msra.mxu0 0.0
  %442 = vmatprep.subr.mxu0 0.0
  %443 = vmatpush1.msra.mxu0 0.0
  %444 = vmatprep.subr.mxu0 0.0
  %445 = vmatpush1.msra.mxu0 0.0
  %446 = vmatprep.subr.mxu0 0.0
  %447 = vmatpush1.msra.mxu0 0.0
  %448 = vmatprep.subr.mxu0 0.0
  %449 = vmatpush1.msra.mxu0 0.0
  %450 = vmatprep.subr.mxu0 0.0
  %451 = vmatpush1.msra.mxu0 0.0
  %452 = vmatprep.subr.mxu0 0.0
  %453 = vmatpush1.msra.mxu0 0.0
  %454 = vmatprep.subr.mxu0 0.0
  %455 = vmatpush1.msra.mxu0 0.0
  %456 = vmatprep.subr.mxu0 0.0
  %457 = vmatpush1.msra.mxu0 0.0
  %458 = vmatprep.subr.mxu0 0.0
  %459 = vmatpush1.msra.mxu0 %v21
  %460 = vmatprep.subr.mxu0 0.0
  %461 = vmatpush1.msra.mxu0 %v20
  %462 = vmatprep.subr.mxu0 0.0
  %463 = vmatpush1.msra.mxu0 %v19
  %464 = vmatprep.subr.mxu0 0.0
  %465 = vmatpush1.msra.mxu0 %v18
  %466 = vmatprep.subr.mxu0 0.0
  %467 = vmatpush2.msra.mxu0 0.0
  %468 = vmatprep.subr.mxu0 0.0
  %469 = vmatpush2.msra.mxu0 0.0
  %470 = vmatprep.subr.mxu0 0.0
  %471 = vmatpush2.msra.mxu0 0.0
  %472 = vmatprep.subr.mxu0 0.0
  %473 = vmatpush2.msra.mxu0 0.0
  %474 = vmatprep.subr.mxu0 0.0
  %475 = vmatpush2.msra.mxu0 0.0
  %476 = vmatprep.subr.mxu0 0.0
  %477 = vmatpush2.msra.mxu0 0.0
  %478 = vmatprep.subr.mxu0 0.0
  %479 = vmatpush2.msra.mxu0 0.0
  %480 = vmatprep.subr.mxu0 0.0
  %481 = vmatpush2.msra.mxu0 0.0
  %482 = vmatprep.subr.mxu0 0.0
  %483 = vmatpush2.msra.mxu0 0.0
  %484 = vmatprep.subr.mxu0 0.0
  %485 = vmatpush2.msra.mxu0 0.0
  %486 = vmatprep.subr.mxu0 0.0
  %487 = vmatpush2.msra.mxu0 0.0
  %488 = vmatprep.subr.mxu0 0.0
  %489 = vmatpush2.msra.mxu0 0.0
  %490 = vmatprep.subr.mxu0 0.0
  %491 = vmatpush2.msra.mxu0 0.0
  %492 = vmatprep.subr.mxu0 0.0
  %493 = vmatpush2.msra.mxu0 0.0
  %494 = vmatprep.subr.mxu0 0.0
  %495 = vmatpush2.msra.mxu0 0.0
  %496 = vmatprep.subr.mxu0 0.0
  %497 = vmatpush2.msra.mxu0 0.0
  %498 = vmatprep.mubr.f32.mxu0 0.0
  %499 = vmatmul.mubr.f32.gmra.mxu0 %v432
  %v500 = vpop.f32.mrf.mxu0
  %v501 = vadd.f32 %v430, %v500
  %v502 = vpop.f32.mrf.mxu0
  %503 = vdwg.mxu0
  %v504 = vxor.u32 %v501, 2147483648
  %v505 = vmul.f32 %v504, 1.442695
  %v506 = vpow.pop %v505
  %v507 = vadd.f32 %v506, 1.0
  %v508 = vrcp.pop %v507
  %v509 = vmul.f32 1.0, %v508
  %v510 = vtanh.pop %v501
  %v511 = vmul.f32 %v509, %v420
  %513 = vrot.lane.b32.xlu0 %v510, 64
  %v514 = vpop.permute.xlu0 %513
  %v516 = vmul.f32 %v509, %v514
  %518 = vrot.lane.b32.xlu0 %v516, 32
  %v519 = vpop.permute.xlu0 %518
  %v521 = vadd.f32 %v511, %v519
  %v522 = vtanh.pop %v521
  %524 = vrot.lane.b32.xlu0 %v522, 64
  %v525 = vpop.permute.xlu0 %524
  %v527 = vmul.f32 %v509, %v525
  %529 = vrot.lane.b32.xlu0 %v527, 32
  %v530 = vpop.permute.xlu0 %529
  %v531 = vsel %vm122, %v530, 0
  %533 = vmatprep.subr.mxu0 0.0
  %534 = vmatpush1.msra.mxu0 0.0
  %535 = vmatprep.subr.mxu0 0.0
  %536 = vmatpush1.msra.mxu0 0.0
  %537 = vmatprep.subr.mxu0 0.0
  %538 = vmatpush1.msra.mxu0 0.0
  %539 = vmatprep.subr.mxu0 0.0
  %540 = vmatpush1.msra.mxu0 0.0
  %541 = vmatprep.subr.mxu0 0.0
  %542 = vmatpush1.msra.mxu0 0.0
  %543 = vmatprep.subr.mxu0 0.0
  %544 = vmatpush1.msra.mxu0 0.0
  %545 = vmatprep.subr.mxu0 0.0
  %546 = vmatpush1.msra.mxu0 0.0
  %547 = vmatprep.subr.mxu0 0.0
  %548 = vmatpush1.msra.mxu0 0.0
  %549 = vmatprep.subr.mxu0 0.0
  %550 = vmatpush1.msra.mxu0 0.0
  %551 = vmatprep.subr.mxu0 0.0
  %552 = vmatpush1.msra.mxu0 0.0
  %553 = vmatprep.subr.mxu0 0.0
  %554 = vmatpush1.msra.mxu0 0.0
  %555 = vmatprep.subr.mxu0 0.0
  %556 = vmatpush1.msra.mxu0 0.0
  %557 = vmatprep.subr.mxu0 0.0
  %558 = vmatpush1.msra.mxu0 %v21
  %559 = vmatprep.subr.mxu0 0.0
  %560 = vmatpush1.msra.mxu0 %v20
  %561 = vmatprep.subr.mxu0 0.0
  %562 = vmatpush1.msra.mxu0 %v19
  %563 = vmatprep.subr.mxu0 0.0
  %564 = vmatpush1.msra.mxu0 %v18
  %565 = vmatprep.subr.mxu0 0.0
  %566 = vmatpush2.msra.mxu0 0.0
  %567 = vmatprep.subr.mxu0 0.0
  %568 = vmatpush2.msra.mxu0 0.0
  %569 = vmatprep.subr.mxu0 0.0
  %570 = vmatpush2.msra.mxu0 0.0
  %571 = vmatprep.subr.mxu0 0.0
  %572 = vmatpush2.msra.mxu0 0.0
  %573 = vmatprep.subr.mxu0 0.0
  %574 = vmatpush2.msra.mxu0 0.0
  %575 = vmatprep.subr.mxu0 0.0
  %576 = vmatpush2.msra.mxu0 0.0
  %577 = vmatprep.subr.mxu0 0.0
  %578 = vmatpush2.msra.mxu0 0.0
  %579 = vmatprep.subr.mxu0 0.0
  %580 = vmatpush2.msra.mxu0 0.0
  %581 = vmatprep.subr.mxu0 0.0
  %582 = vmatpush2.msra.mxu0 0.0
  %583 = vmatprep.subr.mxu0 0.0
  %584 = vmatpush2.msra.mxu0 0.0
  %585 = vmatprep.subr.mxu0 0.0
  %586 = vmatpush2.msra.mxu0 0.0
  %587 = vmatprep.subr.mxu0 0.0
  %588 = vmatpush2.msra.mxu0 0.0
  %589 = vmatprep.subr.mxu0 0.0
  %590 = vmatpush2.msra.mxu0 0.0
  %591 = vmatprep.subr.mxu0 0.0
  %592 = vmatpush2.msra.mxu0 0.0
  %593 = vmatprep.subr.mxu0 0.0
  %594 = vmatpush2.msra.mxu0 0.0
  %595 = vmatprep.subr.mxu0 0.0
  %596 = vmatpush2.msra.mxu0 0.0
  %597 = vmatprep.mubr.f32.mxu0 0.0
  %598 = vmatmul.mubr.f32.gmra.mxu0 %v531
  %v599 = vpop.f32.mrf.mxu0
  %v600 = vadd.f32 %v119, %v599
  %v601 = vpop.f32.mrf.mxu0
  %602 = vdwg.mxu0
  %v603 = vxor.u32 %v600, 2147483648
  %v604 = vmul.f32 %v603, 1.442695
  %v605 = vpow.pop %v604
  %v606 = vadd.f32 %v605, 1.0
  %v607 = vrcp.pop %v606
  %v608 = vmul.f32 1.0, %v607
  %v609 = vtanh.pop %v600
  %v610 = vmul.f32 %v608, %v521
  %612 = vrot.lane.b32.xlu0 %v609, 64
  %v613 = vpop.permute.xlu0 %612
  %v615 = vmul.f32 %v608, %v613
  %617 = vrot.lane.b32.xlu0 %v615, 32
  %v618 = vpop.permute.xlu0 %617
  %v620 = vadd.f32 %v610, %v618
  %v621 = vtanh.pop %v620
  %623 = vrot.lane.b32.xlu0 %v621, 64
  %v624 = vpop.permute.xlu0 %623
  %v626 = vmul.f32 %v608, %v624
  %628 = vrot.lane.b32.xlu0 %v626, 32
  %v629 = vpop.permute.xlu0 %628
  %v631 = vrot.slane %v119, 2
  %v633 = vsel %vm122, %v629, 0
  %635 = vmatprep.subr.mxu0 0.0
  %636 = vmatpush1.msra.mxu0 0.0
  %637 = vmatprep.subr.mxu0 0.0
  %638 = vmatpush1.msra.mxu0 0.0
  %639 = vmatprep.subr.mxu0 0.0
  %640 = vmatpush1.msra.mxu0 0.0
  %641 = vmatprep.subr.mxu0 0.0
  %642 = vmatpush1.msra.mxu0 0.0
  %643 = vmatprep.subr.mxu0 0.0
  %644 = vmatpush1.msra.mxu0 0.0
  %645 = vmatprep.subr.mxu0 0.0
  %646 = vmatpush1.msra.mxu0 0.0
  %647 = vmatprep.subr.mxu0 0.0
  %648 = vmatpush1.msra.mxu0 0.0
  %649 = vmatprep.subr.mxu0 0.0
  %650 = vmatpush1.msra.mxu0 0.0
  %651 = vmatprep.subr.mxu0 0.0
  %652 = vmatpush1.msra.mxu0 0.0
  %653 = vmatprep.subr.mxu0 0.0
  %654 = vmatpush1.msra.mxu0 0.0
  %655 = vmatprep.subr.mxu0 0.0
  %656 = vmatpush1.msra.mxu0 0.0
  %657 = vmatprep.subr.mxu0 0.0
  %658 = vmatpush1.msra.mxu0 0.0
  %659 = vmatprep.subr.mxu0 0.0
  %660 = vmatpush1.msra.mxu0 %v21
  %661 = vmatprep.subr.mxu0 0.0
  %662 = vmatpush1.msra.mxu0 %v20
  %663 = vmatprep.subr.mxu0 0.0
  %664 = vmatpush1.msra.mxu0 %v19
  %665 = vmatprep.subr.mxu0 0.0
  %666 = vmatpush1.msra.mxu0 %v18
  %667 = vmatprep.subr.mxu0 0.0
  %668 = vmatpush2.msra.mxu0 0.0
  %669 = vmatprep.subr.mxu0 0.0
  %670 = vmatpush2.msra.mxu0 0.0
  %671 = vmatprep.subr.mxu0 0.0
  %672 = vmatpush2.msra.mxu0 0.0
  %673 = vmatprep.subr.mxu0 0.0
  %674 = vmatpush2.msra.mxu0 0.0
  %675 = vmatprep.subr.mxu0 0.0
  %676 = vmatpush2.msra.mxu0 0.0
  %677 = vmatprep.subr.mxu0 0.0
  %678 = vmatpush2.msra.mxu0 0.0
  %679 = vmatprep.subr.mxu0 0.0
  %680 = vmatpush2.msra.mxu0 0.0
  %681 = vmatprep.subr.mxu0 0.0
  %682 = vmatpush2.msra.mxu0 0.0
  %683 = vmatprep.subr.mxu0 0.0
  %684 = vmatpush2.msra.mxu0 0.0
  %685 = vmatprep.subr.mxu0 0.0
  %686 = vmatpush2.msra.mxu0 0.0
  %687 = vmatprep.subr.mxu0 0.0
  %688 = vmatpush2.msra.mxu0 0.0
  %689 = vmatprep.subr.mxu0 0.0
  %690 = vmatpush2.msra.mxu0 0.0
  %691 = vmatprep.subr.mxu0 0.0
  %692 = vmatpush2.msra.mxu0 0.0
  %693 = vmatprep.subr.mxu0 0.0
  %694 = vmatpush2.msra.mxu0 0.0
  %695 = vmatprep.subr.mxu0 0.0
  %696 = vmatpush2.msra.mxu0 0.0
  %697 = vmatprep.subr.mxu0 0.0
  %698 = vmatpush2.msra.mxu0 0.0
  %699 = vmatprep.mubr.f32.mxu0 0.0
  %700 = vmatmul.mubr.f32.gmra.mxu0 %v633
  %v701 = vpop.f32.mrf.mxu0
  %v702 = vadd.f32 %v631, %v701
  %v703 = vpop.f32.mrf.mxu0
  %704 = vdwg.mxu0
  %v705 = vxor.u32 %v702, 2147483648
  %v706 = vmul.f32 %v705, 1.442695
  %v707 = vpow.pop %v706
  %v708 = vadd.f32 %v707, 1.0
  %v709 = vrcp.pop %v708
  %v710 = vmul.f32 1.0, %v709
  %v711 = vtanh.pop %v702
  %v712 = vmul.f32 %v710, %v620
  %714 = vrot.lane.b32.xlu0 %v711, 64
  %v715 = vpop.permute.xlu0 %714
  %v717 = vmul.f32 %v710, %v715
  %719 = vrot.lane.b32.xlu0 %v717, 32
  %v720 = vpop.permute.xlu0 %719
  %v722 = vadd.f32 %v712, %v720
  %v723 = vtanh.pop %v722
  %725 = vrot.lane.b32.xlu0 %v723, 64
  %v726 = vpop.permute.xlu0 %725
  %v728 = vmul.f32 %v710, %v726
  %730 = vrot.lane.b32.xlu0 %v728, 32
  %v731 = vpop.permute.xlu0 %730
  %v732 = vrot.slane %v119, 4
  %v734 = vsel %vm122, %v731, 0
  %736 = vmatprep.subr.mxu0 0.0
  %737 = vmatpush1.msra.mxu0 0.0
  %738 = vmatprep.subr.mxu0 0.0
  %739 = vmatpush1.msra.mxu0 0.0
  %740 = vmatprep.subr.mxu0 0.0
  %741 = vmatpush1.msra.mxu0 0.0
  %742 = vmatprep.subr.mxu0 0.0
  %743 = vmatpush1.msra.mxu0 0.0
  %744 = vmatprep.subr.mxu0 0.0
  %745 = vmatpush1.msra.mxu0 0.0
  %746 = vmatprep.subr.mxu0 0.0
  %747 = vmatpush1.msra.mxu0 0.0
  %748 = vmatprep.subr.mxu0 0.0
  %749 = vmatpush1.msra.mxu0 0.0
  %750 = vmatprep.subr.mxu0 0.0
  %751 = vmatpush1.msra.mxu0 0.0
  %752 = vmatprep.subr.mxu0 0.0
  %753 = vmatpush1.msra.mxu0 0.0
  %754 = vmatprep.subr.mxu0 0.0
  %755 = vmatpush1.msra.mxu0 0.0
  %756 = vmatprep.subr.mxu0 0.0
  %757 = vmatpush1.msra.mxu0 0.0
  %758 = vmatprep.subr.mxu0 0.0
  %759 = vmatpush1.msra.mxu0 0.0
  %760 = vmatprep.subr.mxu0 0.0
  %761 = vmatpush1.msra.mxu0 %v21
  %762 = vmatprep.subr.mxu0 0.0
  %763 = vmatpush1.msra.mxu0 %v20
  %764 = vmatprep.subr.mxu0 0.0
  %765 = vmatpush1.msra.mxu0 %v19
  %766 = vmatprep.subr.mxu0 0.0
  %767 = vmatpush1.msra.mxu0 %v18
  %768 = vmatprep.subr.mxu0 0.0
  %769 = vmatpush2.msra.mxu0 0.0
  %770 = vmatprep.subr.mxu0 0.0
  %771 = vmatpush2.msra.mxu0 0.0
  %772 = vmatprep.subr.mxu0 0.0
  %773 = vmatpush2.msra.mxu0 0.0
  %774 = vmatprep.subr.mxu0 0.0
  %775 = vmatpush2.msra.mxu0 0.0
  %776 = vmatprep.subr.mxu0 0.0
  %777 = vmatpush2.msra.mxu0 0.0
  %778 = vmatprep.subr.mxu0 0.0
  %779 = vmatpush2.msra.mxu0 0.0
  %780 = vmatprep.subr.mxu0 0.0
  %781 = vmatpush2.msra.mxu0 0.0
  %782 = vmatprep.subr.mxu0 0.0
  %783 = vmatpush2.msra.mxu0 0.0
  %784 = vmatprep.subr.mxu0 0.0
  %785 = vmatpush2.msra.mxu0 0.0
  %786 = vmatprep.subr.mxu0 0.0
  %787 = vmatpush2.msra.mxu0 0.0
  %788 = vmatprep.subr.mxu0 0.0
  %789 = vmatpush2.msra.mxu0 0.0
  %790 = vmatprep.subr.mxu0 0.0
  %791 = vmatpush2.msra.mxu0 0.0
  %792 = vmatprep.subr.mxu0 0.0
  %793 = vmatpush2.msra.mxu0 0.0
  %794 = vmatprep.subr.mxu0 0.0
  %795 = vmatpush2.msra.mxu0 0.0
  %796 = vmatprep.subr.mxu0 0.0
  %797 = vmatpush2.msra.mxu0 0.0
  %798 = vmatprep.subr.mxu0 0.0
  %799 = vmatpush2.msra.mxu0 0.0
  %800 = vmatprep.mubr.f32.mxu0 0.0
  %801 = vmatmul.mubr.f32.gmra.mxu0 %v734
  %v802 = vpop.f32.mrf.mxu0
  %v803 = vadd.f32 %v732, %v802
  %v804 = vpop.f32.mrf.mxu0
  %805 = vdwg.mxu0
  %v806 = vxor.u32 %v803, 2147483648
  %v807 = vmul.f32 %v806, 1.442695
  %v808 = vpow.pop %v807
  %v809 = vadd.f32 %v808, 1.0
  %v810 = vrcp.pop %v809
  %v811 = vmul.f32 1.0, %v810
  %v812 = vtanh.pop %v803
  %v813 = vmul.f32 %v811, %v722
  %815 = vrot.lane.b32.xlu0 %v812, 64
  %v816 = vpop.permute.xlu0 %815
  %v818 = vmul.f32 %v811, %v816
  %820 = vrot.lane.b32.xlu0 %v818, 32
  %v821 = vpop.permute.xlu0 %820
  %v823 = vadd.f32 %v813, %v821
  %v824 = vtanh.pop %v823
  %826 = vrot.lane.b32.xlu0 %v824, 64
  %v827 = vpop.permute.xlu0 %826
  %v829 = vmul.f32 %v811, %v827
  %831 = vrot.lane.b32.xlu0 %v829, 32
  %v832 = vpop.permute.xlu0 %831
  %v833 = vrot.slane %v119, 6
  %v835 = vsel %vm122, %v832, 0
  %837 = vmatprep.subr.mxu0 0.0
  %838 = vmatpush1.msra.mxu0 0.0
  %839 = vmatprep.subr.mxu0 0.0
  %840 = vmatpush1.msra.mxu0 0.0
  %841 = vmatprep.subr.mxu0 0.0
  %842 = vmatpush1.msra.mxu0 0.0
  %843 = vmatprep.subr.mxu0 0.0
  %844 = vmatpush1.msra.mxu0 0.0
  %845 = vmatprep.subr.mxu0 0.0
  %846 = vmatpush1.msra.mxu0 0.0
  %847 = vmatprep.subr.mxu0 0.0
  %848 = vmatpush1.msra.mxu0 0.0
  %849 = vmatprep.subr.mxu0 0.0
  %850 = vmatpush1.msra.mxu0 0.0
  %851 = vmatprep.subr.mxu0 0.0
  %852 = vmatpush1.msra.mxu0 0.0
  %853 = vmatprep.subr.mxu0 0.0
  %854 = vmatpush1.msra.mxu0 0.0
  %855 = vmatprep.subr.mxu0 0.0
  %856 = vmatpush1.msra.mxu0 0.0
  %857 = vmatprep.subr.mxu0 0.0
  %858 = vmatpush1.msra.mxu0 0.0
  %859 = vmatprep.subr.mxu0 0.0
  %860 = vmatpush1.msra.mxu0 0.0
  %861 = vmatprep.subr.mxu0 0.0
  %862 = vmatpush1.msra.mxu0 %v21
  %863 = vmatprep.subr.mxu0 0.0
  %864 = vmatpush1.msra.mxu0 %v20
  %865 = vmatprep.subr.mxu0 0.0
  %866 = vmatpush1.msra.mxu0 %v19
  %867 = vmatprep.subr.mxu0 0.0
  %868 = vmatpush1.msra.mxu0 %v18
  %869 = vmatprep.subr.mxu0 0.0
  %870 = vmatpush2.msra.mxu0 0.0
  %871 = vmatprep.subr.mxu0 0.0
  %872 = vmatpush2.msra.mxu0 0.0
  %873 = vmatprep.subr.mxu0 0.0
  %874 = vmatpush2.msra.mxu0 0.0
  %875 = vmatprep.subr.mxu0 0.0
  %876 = vmatpush2.msra.mxu0 0.0
  %877 = vmatprep.subr.mxu0 0.0
  %878 = vmatpush2.msra.mxu0 0.0
  %879 = vmatprep.subr.mxu0 0.0
  %880 = vmatpush2.msra.mxu0 0.0
  %881 = vmatprep.subr.mxu0 0.0
  %882 = vmatpush2.msra.mxu0 0.0
  %883 = vmatprep.subr.mxu0 0.0
  %884 = vmatpush2.msra.mxu0 0.0
  %885 = vmatprep.subr.mxu0 0.0
  %886 = vmatpush2.msra.mxu0 0.0
  %887 = vmatprep.subr.mxu0 0.0
  %888 = vmatpush2.msra.mxu0 0.0
  %889 = vmatprep.subr.mxu0 0.0
  %890 = vmatpush2.msra.mxu0 0.0
  %891 = vmatprep.subr.mxu0 0.0
  %892 = vmatpush2.msra.mxu0 0.0
  %893 = vmatprep.subr.mxu0 0.0
  %894 = vmatpush2.msra.mxu0 0.0
  %895 = vmatprep.subr.mxu0 0.0
  %896 = vmatpush2.msra.mxu0 0.0
  %897 = vmatprep.subr.mxu0 0.0
  %898 = vmatpush2.msra.mxu0 0.0
  %899 = vmatprep.subr.mxu0 0.0
  %900 = vmatpush2.msra.mxu0 0.0
  %901 = vmatprep.mubr.f32.mxu0 0.0
  %902 = vmatmul.mubr.f32.gmra.mxu0 %v835
  %v903 = vpop.f32.mrf.mxu0
  %v904 = vadd.f32 %v833, %v903
  %v905 = vpop.f32.mrf.mxu0
  %906 = vdwg.mxu0
  %v907 = vxor.u32 %v904, 2147483648
  %v908 = vmul.f32 %v907, 1.442695
  %v909 = vpow.pop %v908
  %v910 = vadd.f32 %v909, 1.0
  %v911 = vrcp.pop %v910
  %v912 = vmul.f32 1.0, %v911
  %v913 = vtanh.pop %v904
  %v914 = vmul.f32 %v912, %v823
  %916 = vrot.lane.b32.xlu0 %v913, 64
  %v917 = vpop.permute.xlu0 %916
  %v919 = vmul.f32 %v912, %v917
  %921 = vrot.lane.b32.xlu0 %v919, 32
  %v922 = vpop.permute.xlu0 %921
  %v924 = vadd.f32 %v914, %v922
  %v925 = vtanh.pop %v924
  %927 = vrot.lane.b32.xlu0 %v925, 64
  %v928 = vpop.permute.xlu0 %927
  %v930 = vmul.f32 %v912, %v928
  %v931 = vrot.slane %v325, 6
  %v933 = vrot.slane %v426, 4
  %v935 = vrot.slane %v527, 2
  %v937 = vrot.slane %v728, 6
  %v939 = vrot.slane %v829, 4
  %v942 = vrot.slane %v930, 2
  %vm944 = vcmask 1041408
  %v945 = vsel %vm944, %v223, %v931
  %vm946 = vcmask 1043456
  %v947 = vsel %vm946, %v945, %v933
  %vm948 = vcmask 1045504
  %v949 = vsel %vm948, %v947, %v935
  %v950 = vsel %vm944, %v626, %v937
  %v951 = vsel %vm946, %v950, %v939
  %v952 = vsel %vm948, %v951, %v942
  %v953 = vlaneseq
  %v954 = vshrl.u32 %v953, 7
  %v955 = vsub.s32 0, %v954
  %v956 = vrot.slane %v27, %v955
  %959 = vrot.lane.b32.xlu0 %v949, 32
  %v960 = vpop.permute.xlu0 %959
  %961 = vrot.lane.b32.xlu0 %v952, 32
  %v962 = vpop.permute.xlu0 %961
  %v963 = vsel %vm122, %v960, 0
  %v965 = vsel %vm122, %v962, 0
  %967 = vmatprep.subr.mxu0 0.0
  %968 = vmatpush1.msra.mxu0 0.0
  %969 = vmatprep.subr.mxu0 0.0
  %970 = vmatpush1.msra.mxu0 0.0
  %971 = vmatprep.subr.mxu0 0.0
  %972 = vmatpush1.msra.mxu0 0.0
  %973 = vmatprep.subr.mxu0 0.0
  %974 = vmatpush1.msra.mxu0 0.0
  %975 = vmatprep.subr.mxu0 0.0
  %976 = vmatpush1.msra.mxu0 0.0
  %977 = vmatprep.subr.mxu0 0.0
  %978 = vmatpush1.msra.mxu0 0.0
  %979 = vmatprep.subr.mxu0 0.0
  %980 = vmatpush1.msra.mxu0 0.0
  %981 = vmatprep.subr.mxu0 0.0
  %982 = vmatpush1.msra.mxu0 0.0
  %983 = vmatprep.subr.mxu0 0.0
  %984 = vmatpush1.msra.mxu0 0.0
  %985 = vmatprep.subr.mxu0 0.0
  %986 = vmatpush1.msra.mxu0 0.0
  %987 = vmatprep.subr.mxu0 0.0
  %988 = vmatpush1.msra.mxu0 0.0
  %989 = vmatprep.subr.mxu0 0.0
  %990 = vmatpush1.msra.mxu0 0.0
  %991 = vmatprep.subr.mxu0 0.0
  %992 = vmatpush1.msra.mxu0 %v26
  %993 = vmatprep.subr.mxu0 0.0
  %994 = vmatpush1.msra.mxu0 %v25
  %995 = vmatprep.subr.mxu0 0.0
  %996 = vmatpush1.msra.mxu0 %v24
  %997 = vmatprep.subr.mxu0 0.0
  %998 = vmatpush1.msra.mxu0 %v23
  %999 = vmatprep.subr.mxu0 0.0
  %1000 = vmatpush2.msra.mxu0 0.0
  %1001 = vmatprep.subr.mxu0 0.0
  %1002 = vmatpush2.msra.mxu0 0.0
  %1003 = vmatprep.subr.mxu0 0.0
  %1004 = vmatpush2.msra.mxu0 0.0
  %1005 = vmatprep.subr.mxu0 0.0
  %1006 = vmatpush2.msra.mxu0 0.0
  %1007 = vmatprep.subr.mxu0 0.0
  %1008 = vmatpush2.msra.mxu0 0.0
  %1009 = vmatprep.subr.mxu0 0.0
  %1010 = vmatpush2.msra.mxu0 0.0
  %1011 = vmatprep.subr.mxu0 0.0
  %1012 = vmatpush2.msra.mxu0 0.0
  %1013 = vmatprep.subr.mxu0 0.0
  %1014 = vmatpush2.msra.mxu0 0.0
  %1015 = vmatprep.subr.mxu0 0.0
  %1016 = vmatpush2.msra.mxu0 0.0
  %1017 = vmatprep.subr.mxu0 0.0
  %1018 = vmatpush2.msra.mxu0 0.0
  %1019 = vmatprep.subr.mxu0 0.0
  %1020 = vmatpush2.msra.mxu0 0.0
  %1021 = vmatprep.subr.mxu0 0.0
  %1022 = vmatpush2.msra.mxu0 0.0
  %1023 = vmatprep.subr.mxu0 0.0
  %1024 = vmatpush2.msra.mxu0 0.0
  %1025 = vmatprep.subr.mxu0 0.0
  %1026 = vmatpush2.msra.mxu0 0.0
  %1027 = vmatprep.subr.mxu0 0.0
  %1028 = vmatpush2.msra.mxu0 0.0
  %1029 = vmatprep.subr.mxu0 0.0
  %1030 = vmatpush2.msra.mxu0 0.0
  %1031 = vmatprep.mubr.f32.mxu0 0.0
  %1032 = vmatmul.mubr.f32.gmra.mxu0 %v963
  %v1033 = vpop.f32.mrf.mxu0
  %v1034 = vadd.f32 %v956, %v1033
  %v1035 = vpop.f32.mrf.mxu0
  %1036 = vmatprep.mubr.f32.mxu0 0.0
  %1037 = vmatmul.mubr.f32.gmra.mxu0 %v965
  %v1038 = vpop.f32.mrf.mxu0
  %v1039 = vadd.f32 %v956, %v1038
  %v1040 = vpop.f32.mrf.mxu0
  %1041 = vdwg.mxu0
  %v1042 = vxor.u32 %v1034, 2147483648
  %v1043 = vxor.u32 %v1039, 2147483648
  %v1044 = vmul.f32 %v1042, 1.442695
  %v1045 = vpow.pop %v1044
  %v1046 = vmul.f32 %v1043, 1.442695
  %v1047 = vpow.pop %v1046
  %v1048 = vadd.f32 %v1045, 1.0
  %v1049 = vadd.f32 %v1047, 1.0
  %v1050 = vrcp.pop %v1048
  %v1051 = vmul.f32 1.0, %v1050
  %v1052 = vrcp.pop %v1049
  %v1053 = vmul.f32 1.0, %v1052
  %vm1054 = vcmask 31744
  %1055 = vst.msk [vmem:[%s4] sm:$0xff] %vm1054, %v1051
  %1056 = vst.msk [vmem:[%s4 + $0x8] sm:$0xff] %vm1054, %v1053
  // Predicated region
  $region18: #{tpu_custom_call.1} parent=0 // pred_check
    _
  $region19: #{tpu_custom_call.1} parent=0 // pred_check_branch
    %1058 = sbr.rel (0) target = $region21
  $region20: #{tpu_custom_call.1} parent=0 // pred_region
    _
  $region21: #{tpu_custom_call.1} parent=0 // pred_fallthru
    _
  // Predicated region
  $region22: #{tpu_custom_call.1} parent=0 // pred_check
    _
  $region23: #{tpu_custom_call.1} parent=0 // pred_check_branch
    %1060 = sbr.rel (0) target = $region25
  $region24: #{tpu_custom_call.1} parent=0 // pred_region
    _
  $region25: #{tpu_custom_call.1} parent=0 // pred_fallthru
    _

</llo_original>
